<compile_context>
chip_gen: v5e
topology: v5e:2x2
jax: 0.10.0
libtpu: 0.0.40
codegen_flags: <defaults>
</compile_context>

<pallas_src>
import jax
import jax.numpy as jnp
from jax.experimental import pallas as pl
from jax.experimental.pallas import tpu as pltpu

LANES = 128
ACC_ROWS = 64  # accumulator height: 8 f32 vregs -> 8 independent add chains

# Safe fallback if this jax build predates the enum.
_CORE_PARALLEL = getattr(pltpu, "CORE_PARALLEL", "parallel")


def _round_up(x, m):
    return ((x + m - 1) // m) * m


def _chip_config():
    """Returns (max_tile_rows, num_parts, use_core_parallel) per TPU generation."""
    kind = ""
    try:
        kind = jax.devices()[0].device_kind.lower()
    except Exception:
        pass
    if "v7" in kind:
        # 2 TCs/chip, 3.2 TB/s HBM, 32 MiB scoped-VMEM default (64 MiB physical).
        return 8192, 2, True
    if "v6" in kind or "trillium" in kind:
        # 1 TC/chip, 32 MiB scoped-VMEM default.
        return 8192, 1, False
    if "v5e" in kind or "v5 lite" in kind or "v5lite" in kind:
        # 1 TC/chip, 16 MiB scoped-VMEM default: 4096 rows -> 8 MiB double-buffered.
        return 4096, 1, False
    # Unknown (v4/v5p/...): conservative tile; a 2-way "parallel" split engages
    # megacore sharding where it exists and is near-free otherwise.
    return 4096, 2, False


def _pallas_abs_sum(fake2d, real2d):
    """sum(|real2d - fake2d|) over a (rows, 128) slab, computed on-TPU."""
    rows, lanes = fake2d.shape
    assert lanes == LANES and real2d.shape == fake2d.shape and rows > 0

    max_tile_rows, num_parts, use_core_parallel = _chip_config()

    # ACC_ROWS (=64) alignment also covers bf16 (16-row) / 8-bit (32-row)
    # sublane packing, so sub-32-bit inputs never hit a relayout.
    tile_rows = min(max_tile_rows, _round_up(rows, ACC_ROWS))
    nblocks = pl.cdiv(rows, tile_rows)
    if nblocks < num_parts:
        num_parts = 1
    blocks_per_part = pl.cdiv(nblocks, num_parts)
    # Exact cover <=> no partial last block and no duplicated (clamped) block.
    needs_mask = (num_parts * blocks_per_part * tile_rows) != rows
    needs_clamp = (num_parts * blocks_per_part) > nblocks

    if needs_clamp:
        def block_index(p, i):
            return jnp.minimum(p * blocks_per_part + i, nblocks - 1)
    else:
        def block_index(p, i):
            return p * blocks_per_part + i

    in_spec = pl.BlockSpec((tile_rows, LANES),
                           lambda p, i: (block_index(p, i), 0))

    def kernel(fake_ref, real_ref, out_ref):
        p = pl.program_id(0)
        i = pl.program_id(1)

        @pl.when(i == 0)
        def _():
            out_ref[...] = jnp.zeros_like(out_ref)

        def fold_block(mask_rows):
            ad = jnp.abs(real_ref[...].astype(jnp.float32)
                         - fake_ref[...].astype(jnp.float32))
            if mask_rows:
                # Zero rows past the end of the (unpadded) input slab. This
                # also zeroes any duplicated block introduced by clamping.
                logical_block = p * blocks_per_part + i
                row = logical_block * tile_rows + jax.lax.broadcasted_iota(
                    jnp.int32, (tile_rows, LANES), 0)
                ad = jnp.where(row < rows, ad, 0.0)
            # Fold the block onto 8 independent vreg chains (VPU adds only).
            folded = jnp.sum(
                ad.reshape(tile_rows // ACC_ROWS, ACC_ROWS, LANES), axis=0)
            out_ref[...] += folded[None, :, :]

        if needs_mask:
            logical_block = p * blocks_per_part + i
            is_edge = logical_block >= nblocks - 1

            # Steady-state blocks: no iota/compare/select work at all.
            @pl.when(jnp.logical_not(is_edge))
            def _():
                fold_block(False)

            # Last real block + any clamped duplicates: masked path.
            @pl.when(is_edge)
            def _():
                fold_block(True)
        else:
            fold_block(False)

    first_axis = (_CORE_PARALLEL if (use_core_parallel and num_parts > 1)
                  else "parallel")

    partials = pl.pallas_call(
        kernel,
        out_shape=jax.ShapeDtypeStruct((num_parts, ACC_ROWS, LANES), jnp.float32),
        grid_spec=pltpu.PrefetchScalarGridSpec(
            num_scalar_prefetch=0,
            grid=(num_parts, blocks_per_part),
            in_specs=[in_spec, in_spec],
            out_specs=pl.BlockSpec((1, ACC_ROWS, LANES),
                                   lambda p, i: (p, 0, 0)),
        ),
        compiler_params=pltpu.CompilerParams(
            dimension_semantics=(first_axis, "arbitrary")),
    )(fake2d, real2d)
    # Final cross-lane/sublane reduce of (num_parts, 64, 128) f32 in plain JAX.
    return jnp.sum(partials)


def l1_loss(fake, real):
    """Pallas implementation of L1.forward(fake, real). NCHW inputs."""
    if fake.shape != real.shape:
        # F.upsample(..., mode='bilinear') glue: resize spatial dims of fake.
        _, _, H, W = real.shape
        fake = jax.image.resize(fake, (fake.shape[0], fake.shape[1], H, W),
                                method="bilinear")

    n_elems = real.size
    fake_flat = jnp.ravel(fake)   # keep native dtype; cast happens in-kernel
    real_flat = jnp.ravel(real)

    # 128-lane-aligned prefix goes through the Pallas kernel; the tiny
    # (<128 element) tail is summed in plain JAX. No jnp.pad HBM copy.
    main_len = (n_elems // LANES) * LANES

    total = jnp.float32(0.0)
    if main_len > 0:
        fake2d = fake_flat[:main_len].reshape(main_len // LANES, LANES)
        real2d = real_flat[:main_len].reshape(main_len // LANES, LANES)
        total = total + _pallas_abs_sum(fake2d, real2d)
    if main_len < n_elems:
        ft = fake_flat[main_len:].astype(jnp.float32)
        rt = real_flat[main_len:].astype(jnp.float32)
        total = total + jnp.sum(jnp.abs(rt - ft))

    # Fold the x10 scale into the final mean (|10r - 10f| == 10*|r - f|).
    return total * (jnp.float32(10.0) / jnp.float32(n_elems))


if __name__ == "__main__":
    key = jax.random.PRNGKey(0)
    k1, k2, k3, k4 = jax.random.split(key, 4)

    # 1) Small NCHW shapes consistent with the module's conv-feature inputs.
    fake = jax.random.normal(k1, (2, 4, 16, 16), dtype=jnp.float32)
    real = jax.random.normal(k2, (2, 4, 16, 16), dtype=jnp.float32)
    loss = jax.block_until_ready(l1_loss(fake, real))
    ref = jnp.mean(jnp.abs(10.0 * real - 10.0 * fake))
    assert jnp.allclose(loss, ref, rtol=1e-4, atol=1e-5), (loss, ref)

    # 2) Mismatched-shape (bilinear upsample) path.
    fake_small = jax.random.normal(k1, (2, 4, 8, 8), dtype=jnp.float32)
    loss2 = jax.block_until_ready(l1_loss(fake_small, real))
    fake_up = jax.image.resize(fake_small, (2, 4, 16, 16), method="bilinear")
    ref2 = jnp.mean(jnp.abs(10.0 * real - 10.0 * fake_up))
    assert jnp.allclose(loss2, ref2, rtol=1e-4, atol=1e-5), (loss2, ref2)

    # 3) Larger input exercising multiple blocks, the parallel split on
    #    multi-TC chips, and the masked (non-tile-aligned) last-block path.
    fake_l = jax.random.normal(k3, (2, 10, 250, 128), dtype=jnp.float32)
    real_l = jax.random.normal(k4, (2, 10, 250, 128), dtype=jnp.float32)
    loss3 = jax.block_until_ready(l1_loss(fake_l, real_l))
    ref3 = jnp.mean(jnp.abs(10.0 * real_l - 10.0 * fake_l))
    assert jnp.allclose(loss3, ref3, rtol=1e-4, atol=1e-5), (loss3, ref3)

    print("KERNEL_OK")
</pallas_src>

<mosaic_0001>
module attributes {stable_mosaic.version = 11 : i64} {
  func.func @kernel(%arg0: i32, %arg1: i32, %arg2: memref<64x128xf32, #tpu.memory_space<vmem>>, %arg3: memref<64x128xf32, #tpu.memory_space<vmem>>, %arg4: memref<1x64x128xf32, #tpu.memory_space<vmem>>) attributes {dimension_semantics = [#tpu.dimension_semantics<parallel>, #tpu.dimension_semantics<arbitrary>], iteration_bounds = array<i64: 1, 1>, scalar_prefetch = 0 : i64, scratch_operands = 0 : i64, tpu.core_type = #tpu.core_type<tc>, window_params = [{transform_indices = @transform_0, window_bounds = array<i64: 64, 128>}, {transform_indices = @transform_1, window_bounds = array<i64: 64, 128>}, {transform_indices = @transform_2, window_bounds = array<i64: 1, 64, 128>}]} {
    %c0_i32 = arith.constant 0 : i32
    %0 = arith.cmpi eq, %arg1, %c0_i32 : i32
    %1 = arith.extui %0 : i1 to i32
    %c0_i32_0 = arith.constant 0 : i32
    %2 = arith.cmpi ne, %1, %c0_i32_0 : i32
    scf.if %2 {
      %cst = arith.constant 0.000000e+00 : f32
      %11 = vector.broadcast %cst : f32 to vector<1x64x128xf32>
      %c0 = arith.constant 0 : index
      %c0_4 = arith.constant 0 : index
      %c0_5 = arith.constant 0 : index
      %12 = vector.load %arg4[%c0, %c0_4, %c0_5] : memref<1x64x128xf32, #tpu.memory_space<vmem>>, vector<1x64x128xf32>
      tpu.vector_store %arg4[%c0, %c0_4, %c0_5], %11 {strides = array<i32>} : memref<1x64x128xf32, #tpu.memory_space<vmem>>, vector<1x64x128xf32>,
    } else {
    }
    %c1_i32 = arith.constant 1 : i32
    %3 = arith.muli %arg0, %c1_i32 : i32
    %4 = arith.addi %3, %arg1 : i32
    %c0_i32_1 = arith.constant 0 : i32
    %5 = arith.cmpi sge, %4, %c0_i32_1 : i32
    %true = arith.constant true
    %6 = arith.xori %5, %true : i1
    %7 = arith.extui %6 : i1 to i32
    %c0_i32_2 = arith.constant 0 : i32
    %8 = arith.cmpi ne, %7, %c0_i32_2 : i32
    scf.if %8 {
      %c0 = arith.constant 0 : index
      %c0_4 = arith.constant 0 : index
      %11 = vector.load %arg3[%c0, %c0_4] : memref<64x128xf32, #tpu.memory_space<vmem>>, vector<64x128xf32>
      %c0_5 = arith.constant 0 : index
      %c0_6 = arith.constant 0 : index
      %12 = vector.load %arg2[%c0_5, %c0_6] : memref<64x128xf32, #tpu.memory_space<vmem>>, vector<64x128xf32>
      %13 = arith.subf %11, %12 : vector<64x128xf32>
      %14 = math.absf %13 : vector<64x128xf32>
      %15 = vector.shape_cast %14 : vector<64x128xf32> to vector<1x64x128xf32>
      %cst = arith.constant dense<0.000000e+00> : vector<64x128xf32>
      %16 = vector.multi_reduction <add>, %15, %cst [0] : vector<1x64x128xf32> to vector<64x128xf32>
      %c0_7 = arith.constant 0 : index
      %c0_8 = arith.constant 0 : index
      %c0_9 = arith.constant 0 : index
      %17 = vector.load %arg4[%c0_7, %c0_8, %c0_9] : memref<1x64x128xf32, #tpu.memory_space<vmem>>, vector<1x64x128xf32>
      %18 = vector.shape_cast %16 : vector<64x128xf32> to vector<1x64x128xf32>
      %19 = arith.addf %17, %18 : vector<1x64x128xf32>
      %c0_10 = arith.constant 0 : index
      %c0_11 = arith.constant 0 : index
      %c0_12 = arith.constant 0 : index
      %20 = vector.load %arg4[%c0_10, %c0_11, %c0_12] : memref<1x64x128xf32, #tpu.memory_space<vmem>>, vector<1x64x128xf32>
      tpu.vector_store %arg4[%c0_10, %c0_11, %c0_12], %19 {strides = array<i32>} : memref<1x64x128xf32, #tpu.memory_space<vmem>>, vector<1x64x128xf32>,
    } else {
    }
    %9 = arith.extui %5 : i1 to i32
    %c0_i32_3 = arith.constant 0 : i32
    %10 = arith.cmpi ne, %9, %c0_i32_3 : i32
    scf.if %10 {
      %c0 = arith.constant 0 : index
      %c0_4 = arith.constant 0 : index
      %11 = vector.load %arg3[%c0, %c0_4] : memref<64x128xf32, #tpu.memory_space<vmem>>, vector<64x128xf32>
      %c0_5 = arith.constant 0 : index
      %c0_6 = arith.constant 0 : index
      %12 = vector.load %arg2[%c0_5, %c0_6] : memref<64x128xf32, #tpu.memory_space<vmem>>, vector<64x128xf32>
      %13 = arith.subf %11, %12 : vector<64x128xf32>
      %14 = math.absf %13 : vector<64x128xf32>
      %c1_i32_7 = arith.constant 1 : i32
      %15 = arith.muli %arg0, %c1_i32_7 : i32
      %16 = arith.addi %15, %arg1 : i32
      %c64_i32 = arith.constant 64 : i32
      %17 = arith.muli %16, %c64_i32 : i32
      %18 = tpu.iota {dimensions = array<i32: 0>} : vector<64x128xi32>
      %19 = vector.broadcast %17 : i32 to vector<64x128xi32>
      %20 = arith.addi %19, %18 : vector<64x128xi32>
      %c16_i32 = arith.constant 16 : i32
      %21 = vector.broadcast %c16_i32 : i32 to vector<64x128xi32>
      %22 = arith.cmpi slt, %20, %21 : vector<64x128xi32>
      %cst = arith.constant 0.000000e+00 : f32
      %23 = vector.broadcast %cst : f32 to vector<64x128xf32>
      %24 = arith.select %22, %14, %23 : vector<64x128xi1>, vector<64x128xf32>
      %25 = vector.shape_cast %24 : vector<64x128xf32> to vector<1x64x128xf32>
      %cst_8 = arith.constant dense<0.000000e+00> : vector<64x128xf32>
      %26 = vector.multi_reduction <add>, %25, %cst_8 [0] : vector<1x64x128xf32> to vector<64x128xf32>
      %c0_9 = arith.constant 0 : index
      %c0_10 = arith.constant 0 : index
      %c0_11 = arith.constant 0 : index
      %27 = vector.load %arg4[%c0_9, %c0_10, %c0_11] : memref<1x64x128xf32, #tpu.memory_space<vmem>>, vector<1x64x128xf32>
      %28 = vector.shape_cast %26 : vector<64x128xf32> to vector<1x64x128xf32>
      %29 = arith.addf %27, %28 : vector<1x64x128xf32>
      %c0_12 = arith.constant 0 : index
      %c0_13 = arith.constant 0 : index
      %c0_14 = arith.constant 0 : index
      %30 = vector.load %arg4[%c0_12, %c0_13, %c0_14] : memref<1x64x128xf32, #tpu.memory_space<vmem>>, vector<1x64x128xf32>
      tpu.vector_store %arg4[%c0_12, %c0_13, %c0_14], %29 {strides = array<i32>} : memref<1x64x128xf32, #tpu.memory_space<vmem>>, vector<1x64x128xf32>,
    } else {
    }
    return
  }
  func.func @transform_0(%arg0: i32, %arg1: i32) -> (i32, i32) {
    %c1_i32 = arith.constant 1 : i32
    %0 = arith.muli %arg0, %c1_i32 : i32
    %1 = arith.addi %0, %arg1 : i32
    %c0_i32 = arith.constant 0 : i32
    %c0_i32_0 = arith.constant 0 : i32
    return %1, %c0_i32 : i32, i32
  }
  func.func @transform_1(%arg0: i32, %arg1: i32) -> (i32, i32) {
    %c1_i32 = arith.constant 1 : i32
    %0 = arith.muli %arg0, %c1_i32 : i32
    %1 = arith.addi %0, %arg1 : i32
    %c0_i32 = arith.constant 0 : i32
    %c0_i32_0 = arith.constant 0 : i32
    return %1, %c0_i32 : i32, i32
  }
  func.func @transform_2(%arg0: i32, %arg1: i32) -> (i32, i32, i32) {
    %c0_i32 = arith.constant 0 : i32
    %c0_i32_0 = arith.constant 0 : i32
    %c0_i32_1 = arith.constant 0 : i32
    return %arg0, %c0_i32, %c0_i32_0 : i32, i32, i32
  }
}

</mosaic_0001>

<llo_original>
// kernel: tpu_custom_call.1
$region0: #{tpu_custom_call.1}
  #allocation0 [shape = 'u32[]', space=smem, size = 0x4, offset = 0x4, fixed_abs, tag = 'smem constant byte address 0x4 - core index']
  #allocation1 [shape = 'u32[72,128]{1,0:T(1,128)}', space=vmem, size = 0x9000, scoped, tag = 'internal scratch']
  %s0 = inlined_call_operand.hbm [shape: f32[16,128], index: 0, kind: input, shape index: {}]
  %s1 = inlined_call_operand.hbm [shape: f32[16,128], index: 1, kind: input, shape index: {}]
  %s2 = inlined_call_operand.hbm [shape: f32[1,64,128], index: 2, kind: output, shape index: {}]
  %s3 = sld [smem:[#allocation0]]
  $region38: #{tpu_custom_call.1} parent=0
    _
  %s5 = ssub.s32 1, %s3
  %s6 = scalar_select 0, %s5, %s3
  $region1: #{tpu_custom_call.1} parent=0
    #allocation2 [shape = 'u8[32768]{0}', space=vmem, size = 0x8000, scoped, tag = 'input window, operand 0, single buffered']
    #allocation3 [shape = 's32[1]{0}', space=sflag, size = 0x4, scoped, tag = 'scoped memory for tpu_custom_call.1']
    #allocation4 [shape = 's32[1]{0}', space=sflag, size = 0x4, scoped, tag = 'scoped memory for tpu_custom_call.1']
    #allocation5 [shape = 'u8[32768]{0}', space=vmem, size = 0x8000, scoped, tag = 'input window, operand 1, single buffered']
    #allocation6 [shape = 's32[1]{0}', space=sflag, size = 0x4, scoped, tag = 'scoped memory for tpu_custom_call.1']
    #allocation7 [shape = 'u8[32768]{0}', space=vmem, size = 0x8000, scoped, tag = 'output window, operand 0, single buffered']
    %7 = vsyncpa [#allocation3], 0
    %8 = vsyncpa [#allocation6], 0
    %9 = vsyncpa [#allocation4], 0
    // Predicated region
    $region2: #{tpu_custom_call.1} parent=1 // pred_check
      _
    $region3: #{tpu_custom_call.1} parent=1 // pred_check_branch
      %11 = sbr.rel (0) target = $region5
    $region4: #{tpu_custom_call.1} parent=1 // pred_region
      %s12 = sadd.s32 0, 0
      %s13 = smul.u32 8, %s12
      %s14 = ssub.s32 2, %s13
      %s15 = smul.u32 8, %s14
      %s16 = ssub.s32 64, %s15
      %s17 = sshll.u32 %s16, 4
      %18 = vsyncadd [#allocation3], %s17
      %p19 = scmp.ne.s32.totalorder 0, %s15
      %s20 = smul.addr %s13, 8
      %s21 = scalar_lea.hbm %s0, %s20
      %s22 = smul.u32 8, %s14
      %s23 = sshll.u32 %s21, 4
      %s24 = int_to_ptr.hbm [resolvable:$true] %s23
      %s25 = sshll.u32 [#allocation2], 4
      %s26 = int_to_ptr.vmem [resolvable:$true] %s25
      %s27 = sshll.u32 %s22, 4
      %31 = dma.hbm_to_vmem [thread:$0]  (%p19), %s24, %s27, %s26, [#allocation3], 128, 128, 8
    $region5: #{tpu_custom_call.1} parent=1 // pred_fallthru
      _
    // Predicated region
    $region6: #{tpu_custom_call.1} parent=1 // pred_check
      _
    $region7: #{tpu_custom_call.1} parent=1 // pred_check_branch
      %33 = sbr.rel (0) target = $region9
    $region8: #{tpu_custom_call.1} parent=1 // pred_region
      %s34 = sadd.s32 0, 0
      %s35 = smul.u32 8, %s34
      %s36 = ssub.s32 2, %s35
      %s37 = smul.u32 8, %s36
      %s38 = ssub.s32 64, %s37
      %s39 = sshll.u32 %s38, 4
      %40 = vsyncadd [#allocation6], %s39
      %p41 = scmp.ne.s32.totalorder 0, %s37
      %s42 = smul.addr %s35, 8
      %s43 = scalar_lea.hbm %s1, %s42
      %s44 = smul.u32 8, %s36
      %s45 = sshll.u32 %s43, 4
      %s46 = int_to_ptr.hbm [resolvable:$true] %s45
      %s47 = sshll.u32 [#allocation5], 4
      %s48 = int_to_ptr.vmem [resolvable:$true] %s47
      %s49 = sshll.u32 %s44, 4
      %53 = dma.hbm_to_vmem [thread:$0]  (%p41), %s46, %s49, %s48, [#allocation6], 128, 128, 8
    $region9: #{tpu_custom_call.1} parent=1 // pred_fallthru
      _
    // Predicated region
    $region10: #{tpu_custom_call.1} parent=1 // pred_check
      _
    $region11: #{tpu_custom_call.1} parent=1 // pred_check_branch
      %55 = sbr.rel (0) target = $region13
    $region12: #{tpu_custom_call.1} parent=1 // pred_region
      %57 = dma.done [#allocation3], 1024
    $region13: #{tpu_custom_call.1} parent=1 // pred_fallthru
      _
    // Predicated region
    $region14: #{tpu_custom_call.1} parent=1 // pred_check
      _
    $region15: #{tpu_custom_call.1} parent=1 // pred_check_branch
      %59 = sbr.rel (0) target = $region17
    $region16: #{tpu_custom_call.1} parent=1 // pred_region
      %61 = dma.done [#allocation6], 1024
    $region17: #{tpu_custom_call.1} parent=1 // pred_fallthru
      _
    %s62 = sadd.s32 0, 0
    %s63 = smul.u32 8, %s62
    %s64 = ssub.s32 2, %s63
    %s65 = smul.u32 8, %s64
    %s66 = sadd.s32 0, 0
    %s67 = smul.u32 8, %s66
    %s68 = ssub.s32 2, %s67
    %s69 = smul.u32 8, %s68
    %p70 = scmp.eq.s32.totalorder 0, 0
    // Predicated region
    $region18: #{tpu_custom_call.1} parent=1 // pred_check
      %p71 = pneg %p70
    $region19: #{tpu_custom_call.1} parent=1 // pred_check_branch
      %73 = sbr.rel (%p71) target = $region21
    $region20: #{tpu_custom_call.1} parent=1 // pred_region
      %74 = vst [vmem:[#allocation7] sm:$0xff] 0.0
      %75 = vst [vmem:[#allocation7 + $0x8] sm:$0xff] 0.0
      %76 = vst [vmem:[#allocation7 + $0x10] sm:$0xff] 0.0
      %77 = vst [vmem:[#allocation7 + $0x18] sm:$0xff] 0.0
      %78 = vst [vmem:[#allocation7 + $0x20] sm:$0xff] 0.0
      %79 = vst [vmem:[#allocation7 + $0x28] sm:$0xff] 0.0
      %80 = vst [vmem:[#allocation7 + $0x30] sm:$0xff] 0.0
      %81 = vst [vmem:[#allocation7 + $0x38] sm:$0xff] 0.0
    $region21: #{tpu_custom_call.1} parent=1 // pred_fallthru
      _
    %s82 = sadd.s32 0, 0
    %p83 = scmp.ge.s32.totalorder %s82, 0
    %p84 = scmp.lt.s32.totalorder %s82, 0
    // Predicated region
    $region22: #{tpu_custom_call.1} parent=1 // pred_check
      %p85 = pneg %p84
    $region23: #{tpu_custom_call.1} parent=1 // pred_check_branch
      %87 = sbr.rel (%p85) target = $region25
    $region24: #{tpu_custom_call.1} parent=1 // pred_region
      %v88 = vld [vmem:[#allocation5] sm:$0xff]
      %v89 = vld [vmem:[#allocation5 + $0x8] sm:$0xff]
      %v90 = vld [vmem:[#allocation5 + $0x10] sm:$0xff]
      %v91 = vld [vmem:[#allocation5 + $0x18] sm:$0xff]
      %v92 = vld [vmem:[#allocation5 + $0x20] sm:$0xff]
      %v93 = vld [vmem:[#allocation5 + $0x28] sm:$0xff]
      %v94 = vld [vmem:[#allocation5 + $0x30] sm:$0xff]
      %v95 = vld [vmem:[#allocation5 + $0x38] sm:$0xff]
      %v96 = vld [vmem:[#allocation2] sm:$0xff]
      %v97 = vld [vmem:[#allocation2 + $0x8] sm:$0xff]
      %v98 = vld [vmem:[#allocation2 + $0x10] sm:$0xff]
      %v99 = vld [vmem:[#allocation2 + $0x18] sm:$0xff]
      %v100 = vld [vmem:[#allocation2 + $0x20] sm:$0xff]
      %v101 = vld [vmem:[#allocation2 + $0x28] sm:$0xff]
      %v102 = vld [vmem:[#allocation2 + $0x30] sm:$0xff]
      %v103 = vld [vmem:[#allocation2 + $0x38] sm:$0xff]
      %v104 = vsub.f32 %v88, %v96
      %v105 = vsub.f32 %v89, %v97
      %v106 = vsub.f32 %v90, %v98
      %v107 = vsub.f32 %v91, %v99
      %v108 = vsub.f32 %v92, %v100
      %v109 = vsub.f32 %v93, %v101
      %v110 = vsub.f32 %v94, %v102
      %v111 = vsub.f32 %v95, %v103
      %v112 = vand.u32 2147483647, %v104
      %v113 = vand.u32 2147483647, %v105
      %v114 = vand.u32 2147483647, %v106
      %v115 = vand.u32 2147483647, %v107
      %v116 = vand.u32 2147483647, %v108
      %v117 = vand.u32 2147483647, %v109
      %v118 = vand.u32 2147483647, %v110
      %v119 = vand.u32 2147483647, %v111
      %v120 = vadd.f32 %v112, 0.0
      %v121 = vadd.f32 %v113, 0.0
      %v122 = vadd.f32 %v114, 0.0
      %v123 = vadd.f32 %v115, 0.0
      %v124 = vadd.f32 %v116, 0.0
      %v125 = vadd.f32 %v117, 0.0
      %v126 = vadd.f32 %v118, 0.0
      %v127 = vadd.f32 %v119, 0.0
      %v128 = vld [vmem:[#allocation7] sm:$0xff]
      %v129 = vld [vmem:[#allocation7 + $0x8] sm:$0xff]
      %v130 = vld [vmem:[#allocation7 + $0x10] sm:$0xff]
      %v131 = vld [vmem:[#allocation7 + $0x18] sm:$0xff]
      %v132 = vld [vmem:[#allocation7 + $0x20] sm:$0xff]
      %v133 = vld [vmem:[#allocation7 + $0x28] sm:$0xff]
      %v134 = vld [vmem:[#allocation7 + $0x30] sm:$0xff]
      %v135 = vld [vmem:[#allocation7 + $0x38] sm:$0xff]
      %v136 = vadd.f32 %v128, %v120
      %v137 = vadd.f32 %v129, %v121
      %v138 = vadd.f32 %v130, %v122
      %v139 = vadd.f32 %v131, %v123
      %v140 = vadd.f32 %v132, %v124
      %v141 = vadd.f32 %v133, %v125
      %v142 = vadd.f32 %v134, %v126
      %v143 = vadd.f32 %v135, %v127
      %144 = vst [vmem:[#allocation7] sm:$0xff] %v136
      %145 = vst [vmem:[#allocation7 + $0x8] sm:$0xff] %v137
      %146 = vst [vmem:[#allocation7 + $0x10] sm:$0xff] %v138
      %147 = vst [vmem:[#allocation7 + $0x18] sm:$0xff] %v139
      %148 = vst [vmem:[#allocation7 + $0x20] sm:$0xff] %v140
      %149 = vst [vmem:[#allocation7 + $0x28] sm:$0xff] %v141
      %150 = vst [vmem:[#allocation7 + $0x30] sm:$0xff] %v142
      %151 = vst [vmem:[#allocation7 + $0x38] sm:$0xff] %v143
    $region25: #{tpu_custom_call.1} parent=1 // pred_fallthru
      _
    // Predicated region
    $region26: #{tpu_custom_call.1} parent=1 // pred_check
      %p152 = pneg %p83
    $region27: #{tpu_custom_call.1} parent=1 // pred_check_branch
      %154 = sbr.rel (%p152) target = $region29
    $region28: #{tpu_custom_call.1} parent=1 // pred_region
      %v155 = vld [vmem:[#allocation5] sm:$0xff]
      %v156 = vld [vmem:[#allocation5 + $0x8] sm:$0xff]
      %v157 = vld [vmem:[#allocation5 + $0x10] sm:$0xff]
      %v158 = vld [vmem:[#allocation5 + $0x18] sm:$0xff]
      %v159 = vld [vmem:[#allocation5 + $0x20] sm:$0xff]
      %v160 = vld [vmem:[#allocation5 + $0x28] sm:$0xff]
      %v161 = vld [vmem:[#allocation5 + $0x30] sm:$0xff]
      %v162 = vld [vmem:[#allocation5 + $0x38] sm:$0xff]
      %v163 = vld [vmem:[#allocation2] sm:$0xff]
      %v164 = vld [vmem:[#allocation2 + $0x8] sm:$0xff]
      %v165 = vld [vmem:[#allocation2 + $0x10] sm:$0xff]
      %v166 = vld [vmem:[#allocation2 + $0x18] sm:$0xff]
      %v167 = vld [vmem:[#allocation2 + $0x20] sm:$0xff]
      %v168 = vld [vmem:[#allocation2 + $0x28] sm:$0xff]
      %v169 = vld [vmem:[#allocation2 + $0x30] sm:$0xff]
      %v170 = vld [vmem:[#allocation2 + $0x38] sm:$0xff]
      %v171 = vsub.f32 %v155, %v163
      %v172 = vsub.f32 %v156, %v164
      %v173 = vsub.f32 %v157, %v165
      %v174 = vsub.f32 %v158, %v166
      %v175 = vsub.f32 %v159, %v167
      %v176 = vsub.f32 %v160, %v168
      %v177 = vsub.f32 %v161, %v169
      %v178 = vsub.f32 %v162, %v170
      %v179 = vand.u32 2147483647, %v171
      %v180 = vand.u32 2147483647, %v172
      %v181 = vand.u32 2147483647, %v173
      %v182 = vand.u32 2147483647, %v174
      %v183 = vand.u32 2147483647, %v175
      %v184 = vand.u32 2147483647, %v176
      %v185 = vand.u32 2147483647, %v177
      %v186 = vand.u32 2147483647, %v178
      %s187 = smul.u32 %s82, 64
      %v188 = vlaneseq
      %v189 = vshrl.u32 %v188, 7
      %v190 = vadd.s32 %v189, 8
      %v191 = vadd.s32 %v189, 16
      %v192 = vadd.s32 %v189, 24
      %v193 = vadd.s32 %v189, 32
      %v194 = vadd.s32 %v189, 40
      %v195 = vadd.s32 %v189, 48
      %v196 = vadd.s32 %v189, 56
      %v197 = vstv %s187
      %v198 = vadd.s32 %v197, %v189
      %v199 = vadd.s32 %v197, %v190
      %v200 = vadd.s32 %v197, %v191
      %v201 = vadd.s32 %v197, %v192
      %v202 = vadd.s32 %v197, %v193
      %v203 = vadd.s32 %v197, %v194
      %v204 = vadd.s32 %v197, %v195
      %v205 = vadd.s32 %v197, %v196
      %vm206 = vcmp.lt.s32.totalorder %v198, 16
      %vm207 = vcmp.lt.s32.totalorder %v199, 16
      %vm208 = vcmp.lt.s32.totalorder %v200, 16
      %vm209 = vcmp.lt.s32.totalorder %v201, 16
      %vm210 = vcmp.lt.s32.totalorder %v202, 16
      %vm211 = vcmp.lt.s32.totalorder %v203, 16
      %vm212 = vcmp.lt.s32.totalorder %v204, 16
      %vm213 = vcmp.lt.s32.totalorder %v205, 16
      %v214 = vsel %vm206, %v179, 0.0
      %v215 = vsel %vm207, %v180, 0.0
      %v216 = vsel %vm208, %v181, 0.0
      %v217 = vsel %vm209, %v182, 0.0
      %v218 = vsel %vm210, %v183, 0.0
      %v219 = vsel %vm211, %v184, 0.0
      %v220 = vsel %vm212, %v185, 0.0
      %v221 = vsel %vm213, %v186, 0.0
      %v222 = vadd.f32 %v214, 0.0
      %v223 = vadd.f32 %v215, 0.0
      %v224 = vadd.f32 %v216, 0.0
      %v225 = vadd.f32 %v217, 0.0
      %v226 = vadd.f32 %v218, 0.0
      %v227 = vadd.f32 %v219, 0.0
      %v228 = vadd.f32 %v220, 0.0
      %v229 = vadd.f32 %v221, 0.0
      %v230 = vld [vmem:[#allocation7] sm:$0xff]
      %v231 = vld [vmem:[#allocation7 + $0x8] sm:$0xff]
      %v232 = vld [vmem:[#allocation7 + $0x10] sm:$0xff]
      %v233 = vld [vmem:[#allocation7 + $0x18] sm:$0xff]
      %v234 = vld [vmem:[#allocation7 + $0x20] sm:$0xff]
      %v235 = vld [vmem:[#allocation7 + $0x28] sm:$0xff]
      %v236 = vld [vmem:[#allocation7 + $0x30] sm:$0xff]
      %v237 = vld [vmem:[#allocation7 + $0x38] sm:$0xff]
      %v238 = vadd.f32 %v230, %v222
      %v239 = vadd.f32 %v231, %v223
      %v240 = vadd.f32 %v232, %v224
      %v241 = vadd.f32 %v233, %v225
      %v242 = vadd.f32 %v234, %v226
      %v243 = vadd.f32 %v235, %v227
      %v244 = vadd.f32 %v236, %v228
      %v245 = vadd.f32 %v237, %v229
      %246 = vst [vmem:[#allocation7] sm:$0xff] %v238
      %247 = vst [vmem:[#allocation7 + $0x8] sm:$0xff] %v239
      %248 = vst [vmem:[#allocation7 + $0x10] sm:$0xff] %v240
      %249 = vst [vmem:[#allocation7 + $0x18] sm:$0xff] %v241
      %250 = vst [vmem:[#allocation7 + $0x20] sm:$0xff] %v242
      %251 = vst [vmem:[#allocation7 + $0x28] sm:$0xff] %v243
      %252 = vst [vmem:[#allocation7 + $0x30] sm:$0xff] %v244
      %253 = vst [vmem:[#allocation7 + $0x38] sm:$0xff] %v245
    $region29: #{tpu_custom_call.1} parent=1 // pred_fallthru
      _
    // Predicated region
    $region30: #{tpu_custom_call.1} parent=1 // pred_check
      _
    $region31: #{tpu_custom_call.1} parent=1 // pred_check_branch
      %255 = sbr.rel (0) target = $region33
    $region32: #{tpu_custom_call.1} parent=1 // pred_region
      %257 = vsyncadd [#allocation4], 0
      %s258 = sshll.u32 [#allocation7], 4
      %s259 = int_to_ptr.vmem [resolvable:$true] %s258
      %s260 = sshll.u32 %s2, 4
      %s261 = int_to_ptr.hbm [resolvable:$true] %s260
      %266 = dma.vmem_to_hbm [thread:$0]  %s259, 1024, %s261, [#allocation4], 128, 128, 8
    $region33: #{tpu_custom_call.1} parent=1 // pred_fallthru
      _
    // Predicated region
    $region34: #{tpu_custom_call.1} parent=1 // pred_check
      _
    $region35: #{tpu_custom_call.1} parent=1 // pred_check_branch
      %268 = sbr.rel (0) target = $region37
    $region36: #{tpu_custom_call.1} parent=1 // pred_region
      %270 = dma.done [#allocation4], 1024
    $region37: #{tpu_custom_call.1} parent=1 // pred_fallthru
      _
    %271 = vsyncpa [#allocation3], 1
    %272 = vsyncpa [#allocation6], 1
    %273 = vsyncpa [#allocation4], 1

</llo_original>
